<compile_context>
chip_gen: v7x
topology: tpu7x:2x2x1
jax: 0.10.0
libtpu: 0.0.40
codegen_flags: <defaults>
</compile_context>

<pallas_src>
import functools

import jax
import jax.numpy as jnp
from jax import lax
from jax.experimental import pallas as pl
from jax.experimental.pallas import tpu as pltpu


def _mha_kernel(q_ref, k_ref, v_ref,
                gamma_ref, beta_ref,
                wq_ref, wk_ref, wv_ref, wfc_ref,
                out_ref, attn_ref,
                xn_ref, acc_ref,
                *, d_k, eps):
    """Grid = (batch, q_tile, head).  Head axis is the (innermost) reduction."""
    h = pl.program_id(2)
    n_head = pl.num_programs(2)

    # ---- once per (batch, q_tile): LayerNorm(q) + accumulator init ----
    @pl.when(h == 0)
    def _():
        x = q_ref[0]                                        # (tq, D) f32
        mean = jnp.mean(x, axis=-1, keepdims=True)
        cent = x - mean
        var = jnp.mean(cent * cent, axis=-1, keepdims=True)
        xn = cent * lax.rsqrt(var + eps)
        xn = xn * gamma_ref[0] + beta_ref[0]
        xn_ref[...] = xn.astype(xn_ref.dtype)               # bf16 MXU operand
        acc_ref[...] = jnp.zeros_like(acc_ref)

    cdt = jnp.bfloat16
    scale = 1.0 / (d_k ** 0.5)

    wq = wq_ref[0]                                          # (D, dk)  bf16
    wk = wk_ref[0]                                          # (D, dk)  bf16
    wv = wv_ref[0]                                          # (D, dv)  bf16
    wo = wfc_ref[0]                                         # (dv, D)  bf16

    # ---- per-head projections (bf16 operands, f32 accumulation) ----
    qh = jnp.dot(xn_ref[...], wq, preferred_element_type=jnp.float32) * scale
    kh = jnp.dot(k_ref[0], wk, preferred_element_type=jnp.float32)
    vh = jnp.dot(v_ref[0], wv, preferred_element_type=jnp.float32)

    # ---- scores: contract last dims directly (no explicit transpose) ----
    s = lax.dot_general(qh.astype(cdt), kh.astype(cdt),
                        (((1,), (1,)), ((), ())),
                        preferred_element_type=jnp.float32)  # (tq, Lk) f32

    # ---- softmax (f32), reciprocal on the EUP ----
    s = s - jnp.max(s, axis=-1, keepdims=True)
    e = jnp.exp(s)
    a = e * pl.reciprocal(jnp.sum(e, axis=-1, keepdims=True), approx=True)
    attn_ref[0, 0] = a.astype(attn_ref.dtype)

    # ---- PV and folded output projection: acc += (a @ Vh) @ Wfc_h ----
    pv = jnp.dot(a.astype(cdt), vh.astype(cdt),
                 preferred_element_type=jnp.float32)         # (tq, dv)
    acc_ref[...] += jnp.dot(pv.astype(cdt), wo,
                            preferred_element_type=jnp.float32)  # (tq, D)

    # ---- finalize: residual add from the raw (unnormalized) q ----
    @pl.when(h == n_head - 1)
    def _():
        out_ref[0] = (acc_ref[...] + q_ref[0]).astype(out_ref.dtype)


def multi_head_attention(q, k, v, params, *, n_head, d_k, d_v, eps=1e-6):
    """q,k,v: [B, L, D] float32. Returns (out [B,Lq,D], attn [B,H,Lq,Lk])."""
    B, Lq, D = q.shape
    Lk = k.shape[1]
    Lv = v.shape[1]
    assert Lk == Lv

    # q-tile size (keeps the per-step score block O(tq*Lk) for long sequences).
    tq = Lq if Lq <= 128 else 128
    assert Lq % tq == 0, "Lq must be divisible by the q-tile size"
    n_qt = Lq // tq

    cdt = jnp.bfloat16

    gamma = params["ln_gamma"].reshape(1, D).astype(jnp.float32)
    beta = params["ln_beta"].reshape(1, D).astype(jnp.float32)
    # Head-major weight layouts: each grid step DMAs exactly one head's slice.
    wq = params["w_qs"].reshape(D, n_head, d_k).transpose(1, 0, 2).astype(cdt)  # (H, D, dk)
    wk = params["w_ks"].reshape(D, n_head, d_k).transpose(1, 0, 2).astype(cdt)  # (H, D, dk)
    wv = params["w_vs"].reshape(D, n_head, d_v).transpose(1, 0, 2).astype(cdt)  # (H, D, dv)
    wfc = params["fc"].reshape(n_head, d_v, D).astype(cdt)                      # (H, dv, D)

    # k, v only feed MXU matmuls -> ship them to VMEM as bf16 (half the DMA).
    kb = k.astype(cdt)
    vb = v.astype(cdt)

    kernel = functools.partial(_mha_kernel, d_k=d_k, eps=eps)

    out, attn = pl.pallas_call(
        kernel,
        grid=(B, n_qt, n_head),
        in_specs=[
            pl.BlockSpec((1, tq, D), lambda b, qi, h: (b, qi, 0)),   # q (f32, residual + LN)
            pl.BlockSpec((1, Lk, D), lambda b, qi, h: (b, 0, 0)),    # k (bf16)
            pl.BlockSpec((1, Lk, D), lambda b, qi, h: (b, 0, 0)),    # v (bf16)
            pl.BlockSpec((1, D), lambda b, qi, h: (0, 0)),           # ln gamma
            pl.BlockSpec((1, D), lambda b, qi, h: (0, 0)),           # ln beta
            pl.BlockSpec((1, D, d_k), lambda b, qi, h: (h, 0, 0)),   # w_qs head h
            pl.BlockSpec((1, D, d_k), lambda b, qi, h: (h, 0, 0)),   # w_ks head h
            pl.BlockSpec((1, D, d_v), lambda b, qi, h: (h, 0, 0)),   # w_vs head h
            pl.BlockSpec((1, d_v, D), lambda b, qi, h: (h, 0, 0)),   # fc   head h
        ],
        out_specs=[
            pl.BlockSpec((1, tq, D), lambda b, qi, h: (b, qi, 0)),
            pl.BlockSpec((1, 1, tq, Lk), lambda b, qi, h: (b, h, qi, 0)),
        ],
        out_shape=[
            jax.ShapeDtypeStruct((B, Lq, D), q.dtype),
            jax.ShapeDtypeStruct((B, n_head, Lq, Lk), jnp.float32),
        ],
        scratch_shapes=[
            pltpu.VMEM((tq, D), jnp.bfloat16),   # normalized q tile (MXU operand)
            pltpu.VMEM((tq, D), jnp.float32),    # output accumulator (over heads)
        ],
        compiler_params=pltpu.CompilerParams(
            dimension_semantics=("parallel", "parallel", "arbitrary"),
            # Re-derive per generation / problem size (defaults: 16 MiB v5e,
            # 32 MiB v6e/v7x scoped vs 128/128/64 MiB physical).
            vmem_limit_bytes=32 * 1024 * 1024,
        ),
    )(q, kb, vb, gamma, beta, wq, wk, wv, wfc)
    return out, attn


def reference_mha(q, k, v, params, *, n_head, d_k, d_v, eps=1e-6):
    """Pure-JAX f32 reference mirroring the PyTorch forward (dropout=identity)."""
    B, Lq, D = q.shape
    residual = q
    mean = jnp.mean(q, -1, keepdims=True)
    var = jnp.mean((q - mean) ** 2, -1, keepdims=True)
    xn = (q - mean) / jnp.sqrt(var + eps) * params["ln_gamma"] + params["ln_beta"]
    qp = (xn @ params["w_qs"]).reshape(B, Lq, n_head, d_k).transpose(0, 2, 1, 3)
    kp = (k @ params["w_ks"]).reshape(B, -1, n_head, d_k).transpose(0, 2, 1, 3)
    vp = (v @ params["w_vs"]).reshape(B, -1, n_head, d_v).transpose(0, 2, 1, 3)
    attn = jax.nn.softmax((qp / d_k ** 0.5) @ kp.transpose(0, 1, 3, 2), axis=-1)
    o = (attn @ vp).transpose(0, 2, 1, 3).reshape(B, Lq, n_head * d_v)
    o = o @ params["fc"] + residual
    return o, attn


if __name__ == "__main__":
    # Small shapes consistent with the module.
    B, L, d_model = 2, 8, 32
    n_head, d_k, d_v = 4, 8, 8

    key = jax.random.PRNGKey(0)
    kq, kk, kv, k1, k2, k3, k4 = jax.random.split(key, 7)

    q = jax.random.normal(kq, (B, L, d_model), jnp.float32)
    k = jax.random.normal(kk, (B, L, d_model), jnp.float32)
    v = jax.random.normal(kv, (B, L, d_model), jnp.float32)

    params = {
        # stored pre-transposed: y = x @ W  ==  PyTorch Linear(x) with weight W.T
        "w_qs": 0.05 * jax.random.normal(k1, (d_model, n_head * d_k), jnp.float32),
        "w_ks": 0.05 * jax.random.normal(k2, (d_model, n_head * d_k), jnp.float32),
        "w_vs": 0.05 * jax.random.normal(k3, (d_model, n_head * d_v), jnp.float32),
        "fc": 0.05 * jax.random.normal(k4, (n_head * d_v, d_model), jnp.float32),
        "ln_gamma": jnp.ones((d_model,), jnp.float32),
        "ln_beta": jnp.zeros((d_model,), jnp.float32),
    }

    out, attn = multi_head_attention(q, k, v, params,
                                     n_head=n_head, d_k=d_k, d_v=d_v)
    jax.block_until_ready((out, attn))

    ref_out, ref_attn = reference_mha(q, k, v, params,
                                      n_head=n_head, d_k=d_k, d_v=d_v)
    # Tolerances reflect bf16 MXU operands + approximate reciprocal in the kernel
    # (the reference is pure f32).
    assert jnp.allclose(out, ref_out, atol=1e-2, rtol=1e-2)
    assert jnp.allclose(attn, ref_attn, atol=1e-2, rtol=1e-2)
    assert out.shape == (B, L, d_model) and attn.shape == (B, n_head, L, L)

    print("KERNEL_OK")
</pallas_src>

<mosaic_0001>
module attributes {stable_mosaic.version = 11 : i64} {
  func.func @_mha_kernel(%arg0: i32, %arg1: i32, %arg2: i32, %arg3: memref<1x8x32xf32, #tpu.memory_space<vmem>>, %arg4: memref<1x8x32xbf16, #tpu.memory_space<vmem>>, %arg5: memref<1x8x32xbf16, #tpu.memory_space<vmem>>, %arg6: memref<1x32xf32, #tpu.memory_space<vmem>>, %arg7: memref<1x32xf32, #tpu.memory_space<vmem>>, %arg8: memref<1x32x8xbf16, #tpu.memory_space<vmem>>, %arg9: memref<1x32x8xbf16, #tpu.memory_space<vmem>>, %arg10: memref<1x32x8xbf16, #tpu.memory_space<vmem>>, %arg11: memref<1x8x32xbf16, #tpu.memory_space<vmem>>, %arg12: memref<1x8x32xf32, #tpu.memory_space<vmem>>, %arg13: memref<1x1x8x8xf32, #tpu.memory_space<vmem>>, %arg14: memref<8x32xbf16, #tpu.memory_space<vmem>>, %arg15: memref<8x32xf32, #tpu.memory_space<vmem>>) attributes {dimension_semantics = [#tpu.dimension_semantics<parallel>, #tpu.dimension_semantics<parallel>, #tpu.dimension_semantics<arbitrary>], iteration_bounds = array<i64: 2, 1, 4>, scalar_prefetch = 0 : i64, scratch_operands = 2 : i64, tpu.core_type = #tpu.core_type<tc>, window_params = [{transform_indices = @transform_0, window_bounds = array<i64: 1, 8, 32>}, {transform_indices = @transform_1, window_bounds = array<i64: 1, 8, 32>}, {transform_indices = @transform_2, window_bounds = array<i64: 1, 8, 32>}, {pipeline_mode = #tpu.pipeline_mode<synchronous>, transform_indices = @transform_3, window_bounds = array<i64: 1, 32>}, {pipeline_mode = #tpu.pipeline_mode<synchronous>, transform_indices = @transform_4, window_bounds = array<i64: 1, 32>}, {transform_indices = @transform_5, window_bounds = array<i64: 1, 32, 8>}, {transform_indices = @transform_6, window_bounds = array<i64: 1, 32, 8>}, {transform_indices = @transform_7, window_bounds = array<i64: 1, 32, 8>}, {transform_indices = @transform_8, window_bounds = array<i64: 1, 8, 32>}, {transform_indices = @transform_9, window_bounds = array<i64: 1, 8, 32>}, {transform_indices = @transform_10, window_bounds = array<i64: 1, 1, 8, 8>}]} {
    %c0_i32 = arith.constant 0 : i32
    %0 = arith.cmpi eq, %arg2, %c0_i32 : i32
    %1 = arith.extui %0 : i1 to i32
    %c0_i32_0 = arith.constant 0 : i32
    %2 = arith.cmpi ne, %1, %c0_i32_0 : i32
    scf.if %2 {
      %c0_37 = arith.constant 0 : index
      %c0_38 = arith.constant 0 : index
      %c0_39 = arith.constant 0 : index
      %48 = vector.load %arg3[%c0_37, %c0_38, %c0_39] : memref<1x8x32xf32, #tpu.memory_space<vmem>>, vector<1x8x32xf32>
      %49 = vector.shape_cast %48 : vector<1x8x32xf32> to vector<8x32xf32>
      %cst_40 = arith.constant dense<0.000000e+00> : vector<8xf32>
      %50 = vector.multi_reduction <add>, %49, %cst_40 [1] : vector<8x32xf32> to vector<8xf32>
      %51 = vector.shape_cast %50 : vector<8xf32> to vector<8x1xf32>
      %cst_41 = arith.constant 3.200000e+01 : f32
      %52 = vector.broadcast %cst_41 : f32 to vector<8x1xf32>
      %53 = arith.divf %51, %52 : vector<8x1xf32>
      %54 = vector.broadcast %53 : vector<8x1xf32> to vector<8x32xf32>
      %55 = arith.subf %49, %54 : vector<8x32xf32>
      %56 = arith.mulf %55, %55 : vector<8x32xf32>
      %cst_42 = arith.constant dense<0.000000e+00> : vector<8xf32>
      %57 = vector.multi_reduction <add>, %56, %cst_42 [1] : vector<8x32xf32> to vector<8xf32>
      %58 = vector.shape_cast %57 : vector<8xf32> to vector<8x1xf32>
      %cst_43 = arith.constant 3.200000e+01 : f32
      %59 = vector.broadcast %cst_43 : f32 to vector<8x1xf32>
      %60 = arith.divf %58, %59 : vector<8x1xf32>
      %cst_44 = arith.constant 9.99999997E-7 : f32
      %61 = vector.broadcast %cst_44 : f32 to vector<8x1xf32>
      %62 = arith.addf %60, %61 : vector<8x1xf32>
      %63 = math.rsqrt %62 : vector<8x1xf32>
      %64 = vector.broadcast %63 : vector<8x1xf32> to vector<8x32xf32>
      %65 = arith.mulf %55, %64 : vector<8x32xf32>
      %c0_45 = arith.constant 0 : index
      %c0_46 = arith.constant 0 : index
      %66 = vector.load %arg6[%c0_45, %c0_46] : memref<1x32xf32, #tpu.memory_space<vmem>>, vector<1x32xf32>
      %67 = vector.shape_cast %66 : vector<1x32xf32> to vector<32xf32>
      %68 = vector.shape_cast %67 : vector<32xf32> to vector<1x32xf32>
      %69 = vector.broadcast %68 : vector<1x32xf32> to vector<8x32xf32>
      %70 = arith.mulf %65, %69 : vector<8x32xf32>
      %c0_47 = arith.constant 0 : index
      %c0_48 = arith.constant 0 : index
      %71 = vector.load %arg7[%c0_47, %c0_48] : memref<1x32xf32, #tpu.memory_space<vmem>>, vector<1x32xf32>
      %72 = vector.shape_cast %71 : vector<1x32xf32> to vector<32xf32>
      %73 = vector.shape_cast %72 : vector<32xf32> to vector<1x32xf32>
      %74 = vector.broadcast %73 : vector<1x32xf32> to vector<8x32xf32>
      %75 = arith.addf %70, %74 : vector<8x32xf32>
      %76 = arith.truncf %75 : vector<8x32xf32> to vector<8x32xbf16>
      %c0_49 = arith.constant 0 : index
      %c0_50 = arith.constant 0 : index
      %77 = vector.load %arg14[%c0_49, %c0_50] : memref<8x32xbf16, #tpu.memory_space<vmem>>, vector<8x32xbf16>
      tpu.vector_store %arg14[%c0_49, %c0_50], %76 {strides = array<i32>} : memref<8x32xbf16, #tpu.memory_space<vmem>>, vector<8x32xbf16>,
      %cst_51 = arith.constant 0.000000e+00 : f32
      %78 = vector.broadcast %cst_51 : f32 to vector<8x32xf32>
      %c0_52 = arith.constant 0 : index
      %c0_53 = arith.constant 0 : index
      %79 = vector.load %arg15[%c0_52, %c0_53] : memref<8x32xf32, #tpu.memory_space<vmem>>, vector<8x32xf32>
      tpu.vector_store %arg15[%c0_52, %c0_53], %78 {strides = array<i32>} : memref<8x32xf32, #tpu.memory_space<vmem>>, vector<8x32xf32>,
    } else {
    }
    %c0 = arith.constant 0 : index
    %c0_1 = arith.constant 0 : index
    %c0_2 = arith.constant 0 : index
    %3 = vector.load %arg8[%c0, %c0_1, %c0_2] : memref<1x32x8xbf16, #tpu.memory_space<vmem>>, vector<1x32x8xbf16>
    %4 = vector.shape_cast %3 : vector<1x32x8xbf16> to vector<32x8xbf16>
    %c0_3 = arith.constant 0 : index
    %c0_4 = arith.constant 0 : index
    %c0_5 = arith.constant 0 : index
    %5 = vector.load %arg9[%c0_3, %c0_4, %c0_5] : memref<1x32x8xbf16, #tpu.memory_space<vmem>>, vector<1x32x8xbf16>
    %6 = vector.shape_cast %5 : vector<1x32x8xbf16> to vector<32x8xbf16>
    %c0_6 = arith.constant 0 : index
    %c0_7 = arith.constant 0 : index
    %c0_8 = arith.constant 0 : index
    %7 = vector.load %arg10[%c0_6, %c0_7, %c0_8] : memref<1x32x8xbf16, #tpu.memory_space<vmem>>, vector<1x32x8xbf16>
    %8 = vector.shape_cast %7 : vector<1x32x8xbf16> to vector<32x8xbf16>
    %c0_9 = arith.constant 0 : index
    %c0_10 = arith.constant 0 : index
    %c0_11 = arith.constant 0 : index
    %9 = vector.load %arg11[%c0_9, %c0_10, %c0_11] : memref<1x8x32xbf16, #tpu.memory_space<vmem>>, vector<1x8x32xbf16>
    %10 = vector.shape_cast %9 : vector<1x8x32xbf16> to vector<8x32xbf16>
    %c0_12 = arith.constant 0 : index
    %c0_13 = arith.constant 0 : index
    %11 = vector.load %arg14[%c0_12, %c0_13] : memref<8x32xbf16, #tpu.memory_space<vmem>>, vector<8x32xbf16>
    %cst = arith.constant dense<0.000000e+00> : vector<8x8xf32>
    %12 = tpu.matmul %11, %4, %cst {dimension_numbers = #tpu.dot_dimension_numbers<[1], [0], [0], [1], [0, 0, 1, 1], [], []>} : vector<8x32xbf16>, vector<32x8xbf16>, vector<8x8xf32> -> vector<8x8xf32>
    %cst_14 = arith.constant 0.353553385 : f32
    %13 = vector.broadcast %cst_14 : f32 to vector<8x8xf32>
    %14 = arith.mulf %12, %13 : vector<8x8xf32>
    %c0_15 = arith.constant 0 : index
    %c0_16 = arith.constant 0 : index
    %c0_17 = arith.constant 0 : index
    %15 = vector.load %arg4[%c0_15, %c0_16, %c0_17] : memref<1x8x32xbf16, #tpu.memory_space<vmem>>, vector<1x8x32xbf16>
    %16 = vector.shape_cast %15 : vector<1x8x32xbf16> to vector<8x32xbf16>
    %cst_18 = arith.constant dense<0.000000e+00> : vector<8x8xf32>
    %17 = tpu.matmul %16, %6, %cst_18 {dimension_numbers = #tpu.dot_dimension_numbers<[1], [0], [0], [1], [0, 0, 1, 1], [], []>} : vector<8x32xbf16>, vector<32x8xbf16>, vector<8x8xf32> -> vector<8x8xf32>
    %c0_19 = arith.constant 0 : index
    %c0_20 = arith.constant 0 : index
    %c0_21 = arith.constant 0 : index
    %18 = vector.load %arg5[%c0_19, %c0_20, %c0_21] : memref<1x8x32xbf16, #tpu.memory_space<vmem>>, vector<1x8x32xbf16>
    %19 = vector.shape_cast %18 : vector<1x8x32xbf16> to vector<8x32xbf16>
    %cst_22 = arith.constant dense<0.000000e+00> : vector<8x8xf32>
    %20 = tpu.matmul %19, %8, %cst_22 {dimension_numbers = #tpu.dot_dimension_numbers<[1], [0], [0], [1], [0, 0, 1, 1], [], []>} : vector<8x32xbf16>, vector<32x8xbf16>, vector<8x8xf32> -> vector<8x8xf32>
    %21 = arith.truncf %14 : vector<8x8xf32> to vector<8x8xbf16>
    %22 = arith.truncf %17 : vector<8x8xf32> to vector<8x8xbf16>
    %cst_23 = arith.constant dense<0.000000e+00> : vector<8x8xf32>
    %23 = tpu.matmul %21, %22, %cst_23 {dimension_numbers = #tpu.dot_dimension_numbers<[1], [1], [0], [0], [0, 0, 1, 0], [], []>} : vector<8x8xbf16>, vector<8x8xbf16>, vector<8x8xf32> -> vector<8x8xf32>
    %cst_24 = arith.constant dense<0xFF800000> : vector<8xf32>
    %24 = vector.multi_reduction <maximumf>, %23, %cst_24 [1] : vector<8x8xf32> to vector<8xf32>
    %25 = vector.shape_cast %24 : vector<8xf32> to vector<8x1xf32>
    %26 = vector.broadcast %25 : vector<8x1xf32> to vector<8x8xf32>
    %27 = arith.subf %23, %26 : vector<8x8xf32>
    %28 = math.exp %27 : vector<8x8xf32>
    %cst_25 = arith.constant dense<0.000000e+00> : vector<8xf32>
    %29 = vector.multi_reduction <add>, %28, %cst_25 [1] : vector<8x8xf32> to vector<8xf32>
    %30 = vector.shape_cast %29 : vector<8xf32> to vector<8x1xf32>
    %31 = tpu.reciprocal %30 {approx = true} : vector<8x1xf32> -> vector<8x1xf32>
    %32 = vector.broadcast %31 : vector<8x1xf32> to vector<8x8xf32>
    %33 = arith.mulf %28, %32 : vector<8x8xf32>
    %c0_26 = arith.constant 0 : index
    %c0_27 = arith.constant 0 : index
    %c0_28 = arith.constant 0 : index
    %c0_29 = arith.constant 0 : index
    %34 = vector.load %arg13[%c0_26, %c0_27, %c0_28, %c0_29] : memref<1x1x8x8xf32, #tpu.memory_space<vmem>>, vector<1x1x8x8xf32>
    %35 = vector.shape_cast %34 : vector<1x1x8x8xf32> to vector<8x8xf32>
    %36 = vector.shape_cast %33 : vector<8x8xf32> to vector<1x1x8x8xf32>
    tpu.vector_store %arg13[%c0_26, %c0_27, %c0_28, %c0_29], %36 {strides = array<i32>} : memref<1x1x8x8xf32, #tpu.memory_space<vmem>>, vector<1x1x8x8xf32>,
    %37 = arith.truncf %33 : vector<8x8xf32> to vector<8x8xbf16>
    %38 = arith.truncf %20 : vector<8x8xf32> to vector<8x8xbf16>
    %cst_30 = arith.constant dense<0.000000e+00> : vector<8x8xf32>
    %39 = tpu.matmul %37, %38, %cst_30 {dimension_numbers = #tpu.dot_dimension_numbers<[1], [0], [0], [1], [0, 0, 1, 1], [], []>} : vector<8x8xbf16>, vector<8x8xbf16>, vector<8x8xf32> -> vector<8x8xf32>
    %c0_31 = arith.constant 0 : index
    %c0_32 = arith.constant 0 : index
    %40 = vector.load %arg15[%c0_31, %c0_32] : memref<8x32xf32, #tpu.memory_space<vmem>>, vector<8x32xf32>
    %41 = arith.truncf %39 : vector<8x8xf32> to vector<8x8xbf16>
    %cst_33 = arith.constant dense<0.000000e+00> : vector<8x32xf32>
    %42 = tpu.matmul %41, %10, %cst_33 {dimension_numbers = #tpu.dot_dimension_numbers<[1], [0], [0], [1], [0, 0, 1, 1], [], []>} : vector<8x8xbf16>, vector<8x32xbf16>, vector<8x32xf32> -> vector<8x32xf32>
    %43 = arith.addf %40, %42 : vector<8x32xf32>
    %c0_34 = arith.constant 0 : index
    %c0_35 = arith.constant 0 : index
    %44 = vector.load %arg15[%c0_34, %c0_35] : memref<8x32xf32, #tpu.memory_space<vmem>>, vector<8x32xf32>
    tpu.vector_store %arg15[%c0_34, %c0_35], %43 {strides = array<i32>} : memref<8x32xf32, #tpu.memory_space<vmem>>, vector<8x32xf32>,
    %c3_i32 = arith.constant 3 : i32
    %45 = arith.cmpi eq, %arg2, %c3_i32 : i32
    %46 = arith.extui %45 : i1 to i32
    %c0_i32_36 = arith.constant 0 : i32
    %47 = arith.cmpi ne, %46, %c0_i32_36 : i32
    scf.if %47 {
      %c0_37 = arith.constant 0 : index
      %c0_38 = arith.constant 0 : index
      %48 = vector.load %arg15[%c0_37, %c0_38] : memref<8x32xf32, #tpu.memory_space<vmem>>, vector<8x32xf32>
      %c0_39 = arith.constant 0 : index
      %c0_40 = arith.constant 0 : index
      %c0_41 = arith.constant 0 : index
      %49 = vector.load %arg3[%c0_39, %c0_40, %c0_41] : memref<1x8x32xf32, #tpu.memory_space<vmem>>, vector<1x8x32xf32>
      %50 = vector.shape_cast %49 : vector<1x8x32xf32> to vector<8x32xf32>
      %51 = arith.addf %48, %50 : vector<8x32xf32>
      %c0_42 = arith.constant 0 : index
      %c0_43 = arith.constant 0 : index
      %c0_44 = arith.constant 0 : index
      %52 = vector.load %arg12[%c0_42, %c0_43, %c0_44] : memref<1x8x32xf32, #tpu.memory_space<vmem>>, vector<1x8x32xf32>
      %53 = vector.shape_cast %52 : vector<1x8x32xf32> to vector<8x32xf32>
      %54 = vector.shape_cast %51 : vector<8x32xf32> to vector<1x8x32xf32>
      tpu.vector_store %arg12[%c0_42, %c0_43, %c0_44], %54 {strides = array<i32>} : memref<1x8x32xf32, #tpu.memory_space<vmem>>, vector<1x8x32xf32>,
    } else {
    }
    return
  }
  func.func @transform_0(%arg0: i32, %arg1: i32, %arg2: i32) -> (i32, i32, i32) {
    %c0_i32 = arith.constant 0 : i32
    %c0_i32_0 = arith.constant 0 : i32
    return %arg0, %arg1, %c0_i32 : i32, i32, i32
  }
  func.func @transform_1(%arg0: i32, %arg1: i32, %arg2: i32) -> (i32, i32, i32) {
    %c0_i32 = arith.constant 0 : i32
    %c0_i32_0 = arith.constant 0 : i32
    %c0_i32_1 = arith.constant 0 : i32
    return %arg0, %c0_i32, %c0_i32_0 : i32, i32, i32
  }
  func.func @transform_2(%arg0: i32, %arg1: i32, %arg2: i32) -> (i32, i32, i32) {
    %c0_i32 = arith.constant 0 : i32
    %c0_i32_0 = arith.constant 0 : i32
    %c0_i32_1 = arith.constant 0 : i32
    return %arg0, %c0_i32, %c0_i32_0 : i32, i32, i32
  }
  func.func @transform_3(%arg0: i32, %arg1: i32, %arg2: i32) -> (i32, i32) {
    %c0_i32 = arith.constant 0 : i32
    %c0_i32_0 = arith.constant 0 : i32
    %c0_i32_1 = arith.constant 0 : i32
    return %c0_i32, %c0_i32_0 : i32, i32
  }
  func.func @transform_4(%arg0: i32, %arg1: i32, %arg2: i32) -> (i32, i32) {
    %c0_i32 = arith.constant 0 : i32
    %c0_i32_0 = arith.constant 0 : i32
    %c0_i32_1 = arith.constant 0 : i32
    return %c0_i32, %c0_i32_0 : i32, i32
  }
  func.func @transform_5(%arg0: i32, %arg1: i32, %arg2: i32) -> (i32, i32, i32) {
    %c0_i32 = arith.constant 0 : i32
    %c0_i32_0 = arith.constant 0 : i32
    %c0_i32_1 = arith.constant 0 : i32
    return %arg2, %c0_i32, %c0_i32_0 : i32, i32, i32
  }
  func.func @transform_6(%arg0: i32, %arg1: i32, %arg2: i32) -> (i32, i32, i32) {
    %c0_i32 = arith.constant 0 : i32
    %c0_i32_0 = arith.constant 0 : i32
    %c0_i32_1 = arith.constant 0 : i32
    return %arg2, %c0_i32, %c0_i32_0 : i32, i32, i32
  }
  func.func @transform_7(%arg0: i32, %arg1: i32, %arg2: i32) -> (i32, i32, i32) {
    %c0_i32 = arith.constant 0 : i32
    %c0_i32_0 = arith.constant 0 : i32
    %c0_i32_1 = arith.constant 0 : i32
    return %arg2, %c0_i32, %c0_i32_0 : i32, i32, i32
  }
  func.func @transform_8(%arg0: i32, %arg1: i32, %arg2: i32) -> (i32, i32, i32) {
    %c0_i32 = arith.constant 0 : i32
    %c0_i32_0 = arith.constant 0 : i32
    %c0_i32_1 = arith.constant 0 : i32
    return %arg2, %c0_i32, %c0_i32_0 : i32, i32, i32
  }
  func.func @transform_9(%arg0: i32, %arg1: i32, %arg2: i32) -> (i32, i32, i32) {
    %c0_i32 = arith.constant 0 : i32
    %c0_i32_0 = arith.constant 0 : i32
    return %arg0, %arg1, %c0_i32 : i32, i32, i32
  }
  func.func @transform_10(%arg0: i32, %arg1: i32, %arg2: i32) -> (i32, i32, i32, i32) {
    %c0_i32 = arith.constant 0 : i32
    %c0_i32_0 = arith.constant 0 : i32
    return %arg0, %arg2, %arg1, %c0_i32 : i32, i32, i32, i32
  }
}

</mosaic_0001>

<llo_original>
// kernel: tpu_custom_call.1
$region0: #{tpu_custom_call.1}
  #allocation0 [shape = 'u32[]', space=smem, size = 0x4, offset = 0x4, fixed_abs, tag = 'smem constant byte address 0x4 - core index']
  #allocation1 [shape = 'u32[144,128]{1,0:T(1,128)}', space=vmem, size = 0x12000, scoped, tag = 'internal scratch']
  #allocation2 [shape = 'bf16[8,32]{1,0:T(8,128)(2,1)}', space=vmem, size = 0x800, scoped, tag = 'scratch operand']
  #allocation3 [shape = 'f32[8,32]{1,0:T(8,128)}', space=vmem, size = 0x1000, scoped, tag = 'scratch operand']
  %s0 = inlined_call_operand.vmem [shape: f32[2,8,32], index: 0, kind: input, shape index: {}]
  %s1 = inlined_call_operand.vmem [shape: bf16[2,8,32], index: 1, kind: input, shape index: {}]
  %s2 = inlined_call_operand.vmem [shape: bf16[2,8,32], index: 2, kind: input, shape index: {}]
  %s3 = inlined_call_operand.vmem [shape: f32[1,32], index: 3, kind: input, shape index: {}]
  %s4 = inlined_call_operand.vmem [shape: f32[1,32], index: 4, kind: input, shape index: {}]
  %s5 = inlined_call_operand.vmem [shape: bf16[4,32,8], index: 5, kind: input, shape index: {}]
  %s6 = inlined_call_operand.vmem [shape: bf16[4,32,8], index: 6, kind: input, shape index: {}]
  %s7 = inlined_call_operand.vmem [shape: bf16[4,32,8], index: 7, kind: input, shape index: {}]
  %s8 = inlined_call_operand.vmem [shape: bf16[4,8,32], index: 8, kind: input, shape index: {}]
  %s9 = inlined_call_operand.hbm [shape: f32[2,8,32], index: 9, kind: output, shape index: {0}]
  %s10 = inlined_call_operand.hbm [shape: f32[2,4,8,8], index: 10, kind: output, shape index: {1}]
  %11 = xla_tuple %s9, %s10
  %s12 = sld [smem:[#allocation0]]
  $region85: #{tpu_custom_call.1} parent=0
    _
  %s14 = ssub.s32 1, %s12
  %s15 = scalar_select 0, %s14, %s12
  $region1: #{tpu_custom_call.1} parent=0
    #allocation4 [shape = 'u8[8192]{0}', space=vmem, size = 0x2000, scoped, tag = 'output window, operand 0']
    #allocation5 [shape = 's32[2]{0}', space=sflag, size = 0x8, scoped, tag = 'scoped memory for tpu_custom_call.1']
    #allocation6 [shape = 'u8[8192]{0}', space=vmem, size = 0x2000, scoped, tag = 'output window, operand 1']
    #allocation7 [shape = 's32[2]{0}', space=sflag, size = 0x8, scoped, tag = 'scoped memory for tpu_custom_call.1']
    %16 = vsyncpa [#allocation5], 0
    %s17 = scalar_lea.sflag [#allocation5], 1
    %18 = vsyncpa %s17, 0
    %19 = vsyncpa [#allocation7], 0
    %s20 = scalar_lea.sflag [#allocation7], 1
    %21 = vsyncpa %s20, 0
    loop: start=0, step=1, limit=10
    $region2: #{tpu_custom_call.1} parent=1 // loop_pre_header
      _
    $region3: #{tpu_custom_call.1} parent=1 // loop_header
      %s23 = sphi 0, %s27
      %p24 = scmp.ge.s32.totalorder %s23, 10
      %s30 = sphi 0, %s49
      %s31 = sphi 0, %s45
      %s32 = sphi 0, %s41
      %s33 = sphi 0, %s30
      %s34 = sphi 0, %s31
      %s35 = sphi 0, %s32
      %s36 = sphi 0, %s33
      %s37 = sphi 0, %s34
      %s38 = sphi 0, %s35
      %s54 = sphi 0, %s56
      %s57 = sphi 0, %s54
      %s58 = sphi 0, %s57
      %s74 = sphi 0, %s58
      %s80 = sphi 0, %s82
      %s83 = sphi 0, %s80
      %s84 = sphi 0, %s83
      %s100 = sphi 0, %s84
      %s106 = sphi 0, %s108
      %s109 = sphi 0, %s106
      %s110 = sphi 0, %s109
      %s126 = sphi 0, %s110
      %s130 = sphi 0, %s130
      %s132 = sphi 0, %s130
      %s133 = sphi 0, %s132
      %s147 = sphi 0, %s133
      %s151 = sphi 0, %s151
      %s153 = sphi 0, %s151
      %s154 = sphi 0, %s153
      %s168 = sphi 0, %s154
      %s174 = sphi 0, %s176
      %s177 = sphi 0, %s174
      %s178 = sphi 0, %s177
      %s194 = sphi 0, %s178
      %s200 = sphi 0, %s202
      %s203 = sphi 0, %s200
      %s204 = sphi 0, %s203
      %s220 = sphi 0, %s204
      %s226 = sphi 0, %s228
      %s229 = sphi 0, %s226
      %s230 = sphi 0, %s229
      %s246 = sphi 0, %s230
      %s252 = sphi 0, %s254
      %s255 = sphi 0, %s252
      %s256 = sphi 0, %s255
      %s272 = sphi 0, %s256
      %s280 = sphi 0, %s282
      %s283 = sphi 0, %s280
      %s284 = sphi 0, %s283
      %s300 = sphi 0, %s284
      %s310 = sphi 0, %s312
      %s313 = sphi 0, %s310
      %s314 = sphi 0, %s313
      %s330 = sphi 0, %s314
    $region4: #{tpu_custom_call.1} parent=1 // loop_header_branch
      %26 = sbr.rel (%p24) target = $region8
    $region5: #{tpu_custom_call.1} parent=1 // loop_body
      %s28 = ssub.s32 %s23, 1
      %s29 = ssub.s32 %s23, 2
      %s39 = sadd.s32 1, %s32
      %p40 = scmp.ge.s32.totalorder %s39, 4
      %s41 = scalar_select %p40, 0, %s39
      %s42 = sadd.s32 1, %s31
      %s43 = scalar_select %p40, %s42, %s31
      %p44 = scmp.ge.s32.totalorder %s43, 1
      %s45 = scalar_select %p44, 0, %s43
      %s46 = sadd.s32 1, %s30
      %s47 = scalar_select %p44, %s46, %s30
      %p48 = scmp.ge.s32.totalorder %s47, 2
      %s49 = scalar_select %p48, 0, %s47
      %s50 = ssub.s32 %s30, %s49
      %s51 = ssub.s32 %s31, %s45
      %s52 = sor.u32 %s50, %s51
      %p53 = scmp.eq.s32.totalorder %s52, 0
      %s55 = sadd.s32 %s54, 1
      %s56 = scalar_select %p53, %s54, %s55
      %p59 = pneg %p53
      %p60 = scmp.eq.s32.totalorder %s23, 7
      %p61 = por %p59, %p60
      %p62 = scmp.ne.s32.totalorder %s54, %s57
      %p63 = scmp.eq.s32.totalorder %s23, 0
      %p64 = por %p62, %p63
      %p65 = scmp.ne.s32.totalorder %s54, %s57
      %p66 = scmp.eq.s32.totalorder %s28, 7
      %p67 = por %p65, %p66
      %p68 = scmp.ne.s32.totalorder %s57, %s58
      %p69 = scmp.eq.s32.totalorder %s28, 0
      %p70 = por %p68, %p69
      %p71 = scmp.ne.s32.totalorder %s57, %s58
      %p72 = scmp.eq.s32.totalorder %s29, 7
      %p73 = por %p71, %p72
      %p75 = scmp.ne.s32.totalorder %s58, %s74
      %p76 = scmp.eq.s32.totalorder %s29, 0
      %p77 = por %p75, %p76
      %s78 = ssub.s32 %s30, %s49
      %p79 = scmp.eq.s32.totalorder %s78, 0
      %s81 = sadd.s32 %s80, 1
      %s82 = scalar_select %p79, %s80, %s81
      %p85 = pneg %p79
      %p86 = scmp.eq.s32.totalorder %s23, 7
      %p87 = por %p85, %p86
      %p88 = scmp.ne.s32.totalorder %s80, %s83
      %p89 = scmp.eq.s32.totalorder %s23, 0
      %p90 = por %p88, %p89
      %p91 = scmp.ne.s32.totalorder %s80, %s83
      %p92 = scmp.eq.s32.totalorder %s28, 7
      %p93 = por %p91, %p92
      %p94 = scmp.ne.s32.totalorder %s83, %s84
      %p95 = scmp.eq.s32.totalorder %s28, 0
      %p96 = por %p94, %p95
      %p97 = scmp.ne.s32.totalorder %s83, %s84
      %p98 = scmp.eq.s32.totalorder %s29, 7
      %p99 = por %p97, %p98
      %p101 = scmp.ne.s32.totalorder %s84, %s100
      %p102 = scmp.eq.s32.totalorder %s29, 0
      %p103 = por %p101, %p102
      %s104 = ssub.s32 %s30, %s49
      %p105 = scmp.eq.s32.totalorder %s104, 0
      %s107 = sadd.s32 %s106, 1
      %s108 = scalar_select %p105, %s106, %s107
      %p111 = pneg %p105
      %p112 = scmp.eq.s32.totalorder %s23, 7
      %p113 = por %p111, %p112
      %p114 = scmp.ne.s32.totalorder %s106, %s109
      %p115 = scmp.eq.s32.totalorder %s23, 0
      %p116 = por %p114, %p115
      %p117 = scmp.ne.s32.totalorder %s106, %s109
      %p118 = scmp.eq.s32.totalorder %s28, 7
      %p119 = por %p117, %p118
      %p120 = scmp.ne.s32.totalorder %s109, %s110
      %p121 = scmp.eq.s32.totalorder %s28, 0
      %p122 = por %p120, %p121
      %p123 = scmp.ne.s32.totalorder %s109, %s110
      %p124 = scmp.eq.s32.totalorder %s29, 7
      %p125 = por %p123, %p124
      %p127 = scmp.ne.s32.totalorder %s110, %s126
      %p128 = scmp.eq.s32.totalorder %s29, 0
      %p129 = por %p127, %p128
      %s131 = sadd.s32 %s130, 1
      %p134 = scmp.eq.s32.totalorder %s23, 7
      %p135 = scmp.ne.s32.totalorder %s130, %s132
      %p136 = scmp.eq.s32.totalorder %s23, 0
      %p137 = por %p135, %p136
      %p138 = scmp.ne.s32.totalorder %s130, %s132
      %p139 = scmp.eq.s32.totalorder %s28, 7
      %p140 = por %p138, %p139
      %p141 = scmp.ne.s32.totalorder %s132, %s133
      %p142 = scmp.eq.s32.totalorder %s28, 0
      %p143 = por %p141, %p142
      %p144 = scmp.ne.s32.totalorder %s132, %s133
      %p145 = scmp.eq.s32.totalorder %s29, 7
      %p146 = por %p144, %p145
      %p148 = scmp.ne.s32.totalorder %s133, %s147
      %p149 = scmp.eq.s32.totalorder %s29, 0
      %p150 = por %p148, %p149
      %s152 = sadd.s32 %s151, 1
      %p155 = scmp.eq.s32.totalorder %s23, 7
      %p156 = scmp.ne.s32.totalorder %s151, %s153
      %p157 = scmp.eq.s32.totalorder %s23, 0
      %p158 = por %p156, %p157
      %p159 = scmp.ne.s32.totalorder %s151, %s153
      %p160 = scmp.eq.s32.totalorder %s28, 7
      %p161 = por %p159, %p160
      %p162 = scmp.ne.s32.totalorder %s153, %s154
      %p163 = scmp.eq.s32.totalorder %s28, 0
      %p164 = por %p162, %p163
      %p165 = scmp.ne.s32.totalorder %s153, %s154
      %p166 = scmp.eq.s32.totalorder %s29, 7
      %p167 = por %p165, %p166
      %p169 = scmp.ne.s32.totalorder %s154, %s168
      %p170 = scmp.eq.s32.totalorder %s29, 0
      %p171 = por %p169, %p170
      %s172 = ssub.s32 %s32, %s41
      %p173 = scmp.eq.s32.totalorder %s172, 0
      %s175 = sadd.s32 %s174, 1
      %s176 = scalar_select %p173, %s174, %s175
      %p179 = pneg %p173
      %p180 = scmp.eq.s32.totalorder %s23, 7
      %p181 = por %p179, %p180
      %p182 = scmp.ne.s32.totalorder %s174, %s177
      %p183 = scmp.eq.s32.totalorder %s23, 0
      %p184 = por %p182, %p183
      %p185 = scmp.ne.s32.totalorder %s174, %s177
      %p186 = scmp.eq.s32.totalorder %s28, 7
      %p187 = por %p185, %p186
      %p188 = scmp.ne.s32.totalorder %s177, %s178
      %p189 = scmp.eq.s32.totalorder %s28, 0
      %p190 = por %p188, %p189
      %p191 = scmp.ne.s32.totalorder %s177, %s178
      %p192 = scmp.eq.s32.totalorder %s29, 7
      %p193 = por %p191, %p192
      %p195 = scmp.ne.s32.totalorder %s178, %s194
      %p196 = scmp.eq.s32.totalorder %s29, 0
      %p197 = por %p195, %p196
      %s198 = ssub.s32 %s32, %s41
      %p199 = scmp.eq.s32.totalorder %s198, 0
      %s201 = sadd.s32 %s200, 1
      %s202 = scalar_select %p199, %s200, %s201
      %p205 = pneg %p199
      %p206 = scmp.eq.s32.totalorder %s23, 7
      %p207 = por %p205, %p206
      %p208 = scmp.ne.s32.totalorder %s200, %s203
      %p209 = scmp.eq.s32.totalorder %s23, 0
      %p210 = por %p208, %p209
      %p211 = scmp.ne.s32.totalorder %s200, %s203
      %p212 = scmp.eq.s32.totalorder %s28, 7
      %p213 = por %p211, %p212
      %p214 = scmp.ne.s32.totalorder %s203, %s204
      %p215 = scmp.eq.s32.totalorder %s28, 0
      %p216 = por %p214, %p215
      %p217 = scmp.ne.s32.totalorder %s203, %s204
      %p218 = scmp.eq.s32.totalorder %s29, 7
      %p219 = por %p217, %p218
      %p221 = scmp.ne.s32.totalorder %s204, %s220
      %p222 = scmp.eq.s32.totalorder %s29, 0
      %p223 = por %p221, %p222
      %s224 = ssub.s32 %s32, %s41
      %p225 = scmp.eq.s32.totalorder %s224, 0
      %s227 = sadd.s32 %s226, 1
      %s228 = scalar_select %p225, %s226, %s227
      %p231 = pneg %p225
      %p232 = scmp.eq.s32.totalorder %s23, 7
      %p233 = por %p231, %p232
      %p234 = scmp.ne.s32.totalorder %s226, %s229
      %p235 = scmp.eq.s32.totalorder %s23, 0
      %p236 = por %p234, %p235
      %p237 = scmp.ne.s32.totalorder %s226, %s229
      %p238 = scmp.eq.s32.totalorder %s28, 7
      %p239 = por %p237, %p238
      %p240 = scmp.ne.s32.totalorder %s229, %s230
      %p241 = scmp.eq.s32.totalorder %s28, 0
      %p242 = por %p240, %p241
      %p243 = scmp.ne.s32.totalorder %s229, %s230
      %p244 = scmp.eq.s32.totalorder %s29, 7
      %p245 = por %p243, %p244
      %p247 = scmp.ne.s32.totalorder %s230, %s246
      %p248 = scmp.eq.s32.totalorder %s29, 0
      %p249 = por %p247, %p248
      %s250 = ssub.s32 %s32, %s41
      %p251 = scmp.eq.s32.totalorder %s250, 0
      %s253 = sadd.s32 %s252, 1
      %s254 = scalar_select %p251, %s252, %s253
      %p257 = pneg %p251
      %p258 = scmp.eq.s32.totalorder %s23, 7
      %p259 = por %p257, %p258
      %p260 = scmp.ne.s32.totalorder %s252, %s255
      %p261 = scmp.eq.s32.totalorder %s23, 0
      %p262 = por %p260, %p261
      %p263 = scmp.ne.s32.totalorder %s252, %s255
      %p264 = scmp.eq.s32.totalorder %s28, 7
      %p265 = por %p263, %p264
      %p266 = scmp.ne.s32.totalorder %s255, %s256
      %p267 = scmp.eq.s32.totalorder %s28, 0
      %p268 = por %p266, %p267
      %p269 = scmp.ne.s32.totalorder %s255, %s256
      %p270 = scmp.eq.s32.totalorder %s29, 7
      %p271 = por %p269, %p270
      %p273 = scmp.ne.s32.totalorder %s256, %s272
      %p274 = scmp.eq.s32.totalorder %s29, 0
      %p275 = por %p273, %p274
      %s276 = ssub.s32 %s30, %s49
      %s277 = ssub.s32 %s31, %s45
      %s278 = sor.u32 %s276, %s277
      %p279 = scmp.eq.s32.totalorder %s278, 0
      %s281 = sadd.s32 %s280, 1
      %s282 = scalar_select %p279, %s280, %s281
      %p285 = pneg %p279
      %p286 = scmp.eq.s32.totalorder %s23, 7
      %p287 = por %p285, %p286
      %p288 = scmp.ne.s32.totalorder %s280, %s283
      %p289 = scmp.eq.s32.totalorder %s23, 0
      %p290 = por %p288, %p289
      %p291 = scmp.ne.s32.totalorder %s280, %s283
      %p292 = scmp.eq.s32.totalorder %s28, 7
      %p293 = por %p291, %p292
      %p294 = scmp.ne.s32.totalorder %s283, %s284
      %p295 = scmp.eq.s32.totalorder %s28, 0
      %p296 = por %p294, %p295
      %p297 = scmp.ne.s32.totalorder %s283, %s284
      %p298 = scmp.eq.s32.totalorder %s29, 7
      %p299 = por %p297, %p298
      %p301 = scmp.ne.s32.totalorder %s284, %s300
      %p302 = scmp.eq.s32.totalorder %s29, 0
      %p303 = por %p301, %p302
      %s304 = ssub.s32 %s30, %s49
      %s305 = ssub.s32 %s32, %s41
      %s306 = sor.u32 %s304, %s305
      %s307 = ssub.s32 %s31, %s45
      %s308 = sor.u32 %s306, %s307
      %p309 = scmp.eq.s32.totalorder %s308, 0
      %s311 = sadd.s32 %s310, 1
      %s312 = scalar_select %p309, %s310, %s311
      %p315 = pneg %p309
      %p316 = scmp.eq.s32.totalorder %s23, 7
      %p317 = por %p315, %p316
      %p318 = scmp.ne.s32.totalorder %s310, %s313
      %p319 = scmp.eq.s32.totalorder %s23, 0
      %p320 = por %p318, %p319
      %p321 = scmp.ne.s32.totalorder %s310, %s313
      %p322 = scmp.eq.s32.totalorder %s28, 7
      %p323 = por %p321, %p322
      %p324 = scmp.ne.s32.totalorder %s313, %s314
      %p325 = scmp.eq.s32.totalorder %s28, 0
      %p326 = por %p324, %p325
      %p327 = scmp.ne.s32.totalorder %s313, %s314
      %p328 = scmp.eq.s32.totalorder %s29, 7
      %p329 = por %p327, %p328
      %p331 = scmp.ne.s32.totalorder %s314, %s330
      %p332 = scmp.eq.s32.totalorder %s29, 0
      %p333 = por %p331, %p332
      %p334 = scmp.le.s32.totalorder 1, %s23
      %p335 = scmp.lt.s32.totalorder %s23, 9
      %p336 = pnand %p334, %p335
      %p337 = pneg %p336
      // Predicated region
      $region9: #{tpu_custom_call.1} parent=5 // pred_check
        _
      $region10: #{tpu_custom_call.1} parent=5 // pred_check_branch
        %339 = sbr.rel (%p336) target = $region12
      $region11: #{tpu_custom_call.1} parent=5 // pred_region
        %s340 = ssub.s32 %s23, 1
        // Predicated region
        $region13: #{tpu_custom_call.1} parent=11 // pred_check
          %p341 = pneg %p143
        $region14: #{tpu_custom_call.1} parent=11 // pred_check_branch
          %343 = sbr.rel (%p341) target = $region16
        $region15: #{tpu_custom_call.1} parent=11 // pred_region
          _
        $region16: #{tpu_custom_call.1} parent=11 // pred_fallthru
          _
        // Predicated region
        $region17: #{tpu_custom_call.1} parent=11 // pred_check
          %p344 = pneg %p164
        $region18: #{tpu_custom_call.1} parent=11 // pred_check_branch
          %346 = sbr.rel (%p344) target = $region20
        $region19: #{tpu_custom_call.1} parent=11 // pred_region
          _
        $region20: #{tpu_custom_call.1} parent=11 // pred_fallthru
          _
      $region12: #{tpu_custom_call.1} parent=5 // pred_fallthru
        _
      %p347 = scmp.lt.s32.totalorder %s23, 8
      // Predicated region
      $region21: #{tpu_custom_call.1} parent=5 // pred_check
        %p348 = pneg %p347
      $region22: #{tpu_custom_call.1} parent=5 // pred_check_branch
        %350 = sbr.rel (%p348) target = $region24
      $region23: #{tpu_custom_call.1} parent=5 // pred_region
        // Predicated region
        $region25: #{tpu_custom_call.1} parent=23 // pred_check
          %p351 = pneg %p64
        $region26: #{tpu_custom_call.1} parent=23 // pred_check_branch
          %353 = sbr.rel (%p351) target = $region28
        $region27: #{tpu_custom_call.1} parent=23 // pred_region
          %p354 = scmp.lt.s32.totalorder %s30, 1
          %s355 = scalar_select %p354, %s30, 1
          %p356 = scmp.lt.s32.totalorder %s31, 0
          %s357 = scalar_select %p356, %s31, 0
          %s358 = sadd.s32 %s357, %s355
          %s359 = smul.addr %s358, 8
          %s360 = scalar_lea.vmem %s0, %s359
        $region28: #{tpu_custom_call.1} parent=23 // pred_fallthru
          _
        // Predicated region
        $region29: #{tpu_custom_call.1} parent=23 // pred_check
          %p361 = pneg %p90
        $region30: #{tpu_custom_call.1} parent=23 // pred_check_branch
          %363 = sbr.rel (%p361) target = $region32
        $region31: #{tpu_custom_call.1} parent=23 // pred_region
          %p364 = scmp.lt.s32.totalorder %s30, 1
          %s365 = scalar_select %p364, %s30, 1
          %s366 = smul.addr %s365, 4
          %s367 = scalar_lea.vmem %s1, %s366
        $region32: #{tpu_custom_call.1} parent=23 // pred_fallthru
          _
        // Predicated region
        $region33: #{tpu_custom_call.1} parent=23 // pred_check
          %p368 = pneg %p116
        $region34: #{tpu_custom_call.1} parent=23 // pred_check_branch
          %370 = sbr.rel (%p368) target = $region36
        $region35: #{tpu_custom_call.1} parent=23 // pred_region
          %p371 = scmp.lt.s32.totalorder %s30, 1
          %s372 = scalar_select %p371, %s30, 1
          %s373 = smul.addr %s372, 4
          %s374 = scalar_lea.vmem %s2, %s373
        $region36: #{tpu_custom_call.1} parent=23 // pred_fallthru
          _
        // Predicated region
        $region37: #{tpu_custom_call.1} parent=23 // pred_check
          %p375 = pneg %p184
        $region38: #{tpu_custom_call.1} parent=23 // pred_check_branch
          %377 = sbr.rel (%p375) target = $region40
        $region39: #{tpu_custom_call.1} parent=23 // pred_region
          %p378 = scmp.lt.s32.totalorder %s32, 3
          %s379 = scalar_select %p378, %s32, 3
          %s380 = smul.addr %s379, 4
          %s381 = smul.addr %s380, 4
          %s382 = scalar_lea.vmem %s5, %s381
        $region40: #{tpu_custom_call.1} parent=23 // pred_fallthru
          _
        // Predicated region
        $region41: #{tpu_custom_call.1} parent=23 // pred_check
          %p383 = pneg %p210
        $region42: #{tpu_custom_call.1} parent=23 // pred_check_branch
          %385 = sbr.rel (%p383) target = $region44
        $region43: #{tpu_custom_call.1} parent=23 // pred_region
          %p386 = scmp.lt.s32.totalorder %s32, 3
          %s387 = scalar_select %p386, %s32, 3
          %s388 = smul.addr %s387, 4
          %s389 = smul.addr %s388, 4
          %s390 = scalar_lea.vmem %s6, %s389
        $region44: #{tpu_custom_call.1} parent=23 // pred_fallthru
          _
        // Predicated region
        $region45: #{tpu_custom_call.1} parent=23 // pred_check
          %p391 = pneg %p236
        $region46: #{tpu_custom_call.1} parent=23 // pred_check_branch
          %393 = sbr.rel (%p391) target = $region48
        $region47: #{tpu_custom_call.1} parent=23 // pred_region
          %p394 = scmp.lt.s32.totalorder %s32, 3
          %s395 = scalar_select %p394, %s32, 3
          %s396 = smul.addr %s395, 4
          %s397 = smul.addr %s396, 4
          %s398 = scalar_lea.vmem %s7, %s397
        $region48: #{tpu_custom_call.1} parent=23 // pred_fallthru
          _
        // Predicated region
        $region49: #{tpu_custom_call.1} parent=23 // pred_check
          %p399 = pneg %p262
        $region50: #{tpu_custom_call.1} parent=23 // pred_check_branch
          %401 = sbr.rel (%p399) target = $region52
        $region51: #{tpu_custom_call.1} parent=23 // pred_region
          %p402 = scmp.lt.s32.totalorder %s32, 3
          %s403 = scalar_select %p402, %s32, 3
          %s404 = smul.addr %s403, 4
          %s405 = scalar_lea.vmem %s8, %s404
        $region52: #{tpu_custom_call.1} parent=23 // pred_fallthru
          _
      $region24: #{tpu_custom_call.1} parent=5 // pred_fallthru
        _
      %p406 = scmp.le.s32.totalorder 1, %s23
      %p407 = scmp.lt.s32.totalorder %s23, 9
      %p408 = pnand %p406, %p407
      %p409 = pneg %p408
      // Predicated region
      $region53: #{tpu_custom_call.1} parent=5 // pred_check
        _
      $region54: #{tpu_custom_call.1} parent=5 // pred_check_branch
        %411 = sbr.rel (%p408) target = $region56
      $region55: #{tpu_custom_call.1} parent=5 // pred_region
        %s412 = ssub.s32 %s23, 1
        %p413 = scmp.lt.s32.totalorder %s33, 1
        %s414 = scalar_select %p413, %s33, 1
        %p415 = scmp.lt.s32.totalorder %s34, 0
        %s416 = scalar_select %p415, %s34, 0
        %s417 = sadd.s32 %s416, %s414
        %s418 = smul.addr %s417, 8
        %s419 = scalar_lea.vmem %s0, %s418
        %p420 = pneg %p70
        %p421 = pneg %p67
        %p422 = scmp.lt.s32.totalorder %s33, 1
        %s423 = scalar_select %p422, %s33, 1
        %s424 = smul.addr %s423, 4
        %s425 = scalar_lea.vmem %s1, %s424
        %p426 = pneg %p96
        %p427 = pneg %p93
        %p428 = scmp.lt.s32.totalorder %s33, 1
        %s429 = scalar_select %p428, %s33, 1
        %s430 = smul.addr %s429, 4
        %s431 = scalar_lea.vmem %s2, %s430
        %p432 = pneg %p122
        %p433 = pneg %p119
        %p434 = pneg %p143
        %p435 = pneg %p140
        %p436 = pneg %p164
        %p437 = pneg %p161
        %p438 = scmp.lt.s32.totalorder %s35, 3
        %s439 = scalar_select %p438, %s35, 3
        %s440 = smul.addr %s439, 4
        %s441 = smul.addr %s440, 4
        %s442 = scalar_lea.vmem %s5, %s441
        %p443 = pneg %p190
        %p444 = pneg %p187
        %p445 = scmp.lt.s32.totalorder %s35, 3
        %s446 = scalar_select %p445, %s35, 3
        %s447 = smul.addr %s446, 4
        %s448 = smul.addr %s447, 4
        %s449 = scalar_lea.vmem %s6, %s448
        %p450 = pneg %p216
        %p451 = pneg %p213
        %p452 = scmp.lt.s32.totalorder %s35, 3
        %s453 = scalar_select %p452, %s35, 3
        %s454 = smul.addr %s453, 4
        %s455 = smul.addr %s454, 4
        %s456 = scalar_lea.vmem %s7, %s455
        %p457 = pneg %p242
        %p458 = pneg %p239
        %p459 = scmp.lt.s32.totalorder %s35, 3
        %s460 = scalar_select %p459, %s35, 3
        %s461 = smul.addr %s460, 4
        %s462 = scalar_lea.vmem %s8, %s461
        %p463 = pneg %p268
        %p464 = pneg %p265
        %p465 = pneg %p296
        %p466 = pneg %p293
        %s467 = sand.u32 %s283, 1
        %s468 = scalar_lea.sflag [#allocation5], %s467
        %s469 = sand.u32 %s283, 1
        %s470 = smul.addr %s469, 8
        %s471 = scalar_lea.vmem [#allocation4], %s470
        %p472 = pneg %p326
        %p473 = pneg %p323
        %s474 = sand.u32 %s313, 1
        %s475 = scalar_lea.sflag [#allocation7], %s474
        %s476 = sand.u32 %s313, 1
        %s477 = smul.addr %s476, 8
        %s478 = scalar_lea.vmem [#allocation6], %s477
        %p479 = scmp.lt.s32.totalorder %s33, 1
        %s480 = scalar_select %p479, %s33, 1
        %p481 = scmp.lt.s32.totalorder %s34, 0
        %s482 = scalar_select %p481, %s34, 0
        %s483 = sadd.s32 %s482, %s480
        %s484 = smul.addr %s483, 8
        %s485 = scalar_lea.vmem %s0, %s484
        %p486 = scmp.lt.s32.totalorder %s33, 1
        %s487 = scalar_select %p486, %s33, 1
        %s488 = smul.addr %s487, 4
        %s489 = scalar_lea.vmem %s1, %s488
        %p490 = scmp.lt.s32.totalorder %s33, 1
        %s491 = scalar_select %p490, %s33, 1
        %s492 = smul.addr %s491, 4
        %s493 = scalar_lea.vmem %s2, %s492
        %p494 = scmp.lt.s32.totalorder %s35, 3
        %s495 = scalar_select %p494, %s35, 3
        %s496 = smul.addr %s495, 4
        %s497 = smul.addr %s496, 4
        %s498 = scalar_lea.vmem %s5, %s497
        %p499 = scmp.lt.s32.totalorder %s35, 3
        %s500 = scalar_select %p499, %s35, 3
        %s501 = smul.addr %s500, 4
        %s502 = smul.addr %s501, 4
        %s503 = scalar_lea.vmem %s6, %s502
        %p504 = scmp.lt.s32.totalorder %s35, 3
        %s505 = scalar_select %p504, %s35, 3
        %s506 = smul.addr %s505, 4
        %s507 = smul.addr %s506, 4
        %s508 = scalar_lea.vmem %s7, %s507
        %p509 = scmp.lt.s32.totalorder %s35, 3
        %s510 = scalar_select %p509, %s35, 3
        %s511 = smul.addr %s510, 4
        %s512 = scalar_lea.vmem %s8, %s511
        %p514 = scmp.eq.s32.totalorder %s35, 0
        // Predicated region
        $region57: #{tpu_custom_call.1} parent=55 // pred_check
          %p515 = pneg %p514
        $region58: #{tpu_custom_call.1} parent=55 // pred_check_branch
          %517 = sbr.rel (%p515) target = $region60
        $region59: #{tpu_custom_call.1} parent=55 // pred_region
          %v518 = vld [vmem:[%s485] sm:$0xff]
          %vm519 = vcmask 261120
          %v520 = vsel %vm519, %v518, 0.0
          %521 = vadd.xlane.f32.xlu0 %v520
          %v522 = vpop.xlane.xlu0 %521
          %v523 = vrcp.pop 32.0
          %v524 = vmul.f32 %v522, %v523
          %v525 = vsub.f32 %v518, %v524
          %v526 = vmul.f32 %v525, %v525
          %v527 = vsel %vm519, %v526, 0.0
          %528 = vadd.xlane.f32.xlu0 %v527
          %v529 = vpop.xlane.xlu0 %528
          %v530 = vmul.f32 %v529, %v523
          %v531 = vadd.f32 %v530, 1e-06
          %v532 = vrsqrt.pop %v531
          %v533 = vmul.f32 %v525, %v532
          %v534 = vld [vmem:[%s3] sm:$0x1]
          %v536 = vlaneseq
          %v537 = vshrl.u32 %v536, 7
          %v538 = vsub.s32 0, %v537
          %v539 = vrot.slane %v534, %v538
          %v541 = vmul.f32 %v533, %v539
          %v542 = vld [vmem:[%s4] sm:$0x1]
          %v544 = vlaneseq
          %v545 = vshrl.u32 %v544, 7
          %v546 = vsub.s32 0, %v545
          %v547 = vrot.slane %v542, %v546
          %v549 = vadd.f32 %v541, %v547
          %v550 = vpack.c.bf16 %v549, %v549
          %vm551 = vcmask 257024
          %552 = vst.msk [vmem:[#allocation2] sm:$0xf] %vm551, %v550
          %553 = vst.msk [vmem:[#allocation3] sm:$0xff] %vm519, 0.0
        $region60: #{tpu_custom_call.1} parent=55 // pred_fallthru
          _
        %v554 = vld [vmem:[%s498] sm:$0xf]
        %v555 = vld [vmem:[%s498 + $0x4] sm:$0xf]
        %v556 = vld [vmem:[%s498 + $0x8] sm:$0xf]
        %v557 = vld [vmem:[%s498 + $0xc] sm:$0xf]
        %v558 = vld [vmem:[%s503] sm:$0xf]
        %v559 = vld [vmem:[%s503 + $0x4] sm:$0xf]
        %v560 = vld [vmem:[%s503 + $0x8] sm:$0xf]
        %v561 = vld [vmem:[%s503 + $0xc] sm:$0xf]
        %v562 = vld [vmem:[%s508] sm:$0xf]
        %v563 = vld [vmem:[%s508 + $0x4] sm:$0xf]
        %v564 = vld [vmem:[%s508 + $0x8] sm:$0xf]
        %v565 = vld [vmem:[%s508 + $0xc] sm:$0xf]
        %v566 = vld [vmem:[%s512] sm:$0xf]
        %v567 = vld [vmem:[#allocation2] sm:$0xf]
        %v572 = vunpack.c.l.b16 %v554
        %v573 = vunpack.c.l.b16 %v555
        %v574 = vunpack.c.l.b16 %v556
        %v575 = vunpack.c.l.b16 %v557
        %v576 = vpack.c.b16 %v573, %v572
        %v577 = vpack.c.b16 %v575, %v574
        %vm580 = vcmask 261120
        %v582 = vsel %vm580, %v567, 0
        %584 = vmatprep.subr.bf16.mxu0 0
        %585 = vmatpush1.bf16.msra.mxu0 %v576
        %586 = vmatprep.subr.bf16.mxu0 0
        %587 = vmatpush1.bf16.msra.mxu0 %v577
        %588 = vmatprep.subr.bf16.mxu0 0
        %589 = vmatpush1.bf16.msra.mxu0 0
        %590 = vmatprep.subr.bf16.mxu0 0
        %591 = vmatpush1.bf16.msra.mxu0 0
        %592 = vmatprep.subr.bf16.mxu0 0
        %593 = vmatpush1.bf16.msra.mxu0 0
        %594 = vmatprep.subr.bf16.mxu0 0
        %595 = vmatpush1.bf16.msra.mxu0 0
        %596 = vmatprep.subr.bf16.mxu0 0
        %597 = vmatpush1.bf16.msra.mxu0 0
        %598 = vmatprep.subr.bf16.mxu0 0
        %599 = vmatpush1.bf16.msra.mxu0 0
        %600 = vmatprep.subr.bf16.mxu0 0
        %601 = vmatpush1.bf16.msra.mxu0 0
        %602 = vmatprep.subr.bf16.mxu0 0
        %603 = vmatpush1.bf16.msra.mxu0 0
        %604 = vmatprep.subr.bf16.mxu0 0
        %605 = vmatpush1.bf16.msra.mxu0 0
        %606 = vmatprep.subr.bf16.mxu0 0
        %607 = vmatpush1.bf16.msra.mxu0 0
        %608 = vmatprep.subr.bf16.mxu0 0
        %609 = vmatpush1.bf16.msra.mxu0 0
        %610 = vmatprep.subr.bf16.mxu0 0
        %611 = vmatpush1.bf16.msra.mxu0 0
        %612 = vmatprep.subr.bf16.mxu0 0
        %613 = vmatpush1.bf16.msra.mxu0 0
        %614 = vmatprep.subr.bf16.mxu0 0
        %615 = vmatpush1.bf16.msra.mxu0 0
        %616 = vmatprep.mubr.bf16.mxu0 0
        %617 = vmatmul.mubr.bf16.gmra.mrb[0].mxu0 %v582
        %v618 = vpop.f32.mrb[0].mxu0
        %v619 = vadd.f32 0.0, %v618
        %v620 = vpop.f32.mrb[0].mxu0
        %v621 = vpop.f32.mrb[0].mxu0
        %v622 = vpop.f32.mrb[0].mxu0
        %623 = vdwg.mxu0
        %v624 = vmul.f32 %v619, 0.35355338
        %v625 = vld [vmem:[%s489] sm:$0xf]
        %v630 = vunpack.c.l.b16 %v558
        %v631 = vunpack.c.l.b16 %v559
        %v632 = vunpack.c.l.b16 %v560
        %v633 = vunpack.c.l.b16 %v561
        %v634 = vpack.c.b16 %v631, %v630
        %v635 = vpack.c.b16 %v633, %v632
        %v639 = vsel %vm580, %v625, 0
        %641 = vmatprep.subr.bf16.mxu0 0
        %642 = vmatpush1.bf16.msra.mxu0 %v634
        %643 = vmatprep.subr.bf16.mxu0 0
        %644 = vmatpush1.bf16.msra.mxu0 %v635
        %645 = vmatprep.subr.bf16.mxu0 0
        %646 = vmatpush1.bf16.msra.mxu0 0
        %647 = vmatprep.subr.bf16.mxu0 0
        %648 = vmatpush1.bf16.msra.mxu0 0
        %649 = vmatprep.subr.bf16.mxu0 0
        %650 = vmatpush1.bf16.msra.mxu0 0
        %651 = vmatprep.subr.bf16.mxu0 0
        %652 = vmatpush1.bf16.msra.mxu0 0
        %653 = vmatprep.subr.bf16.mxu0 0
        %654 = vmatpush1.bf16.msra.mxu0 0
        %655 = vmatprep.subr.bf16.mxu0 0
        %656 = vmatpush1.bf16.msra.mxu0 0
        %657 = vmatprep.subr.bf16.mxu0 0
        %658 = vmatpush1.bf16.msra.mxu0 0
        %659 = vmatprep.subr.bf16.mxu0 0
        %660 = vmatpush1.bf16.msra.mxu0 0
        %661 = vmatprep.subr.bf16.mxu0 0
        %662 = vmatpush1.bf16.msra.mxu0 0
        %663 = vmatprep.subr.bf16.mxu0 0
        %664 = vmatpush1.bf16.msra.mxu0 0
        %665 = vmatprep.subr.bf16.mxu0 0
        %666 = vmatpush1.bf16.msra.mxu0 0
        %667 = vmatprep.subr.bf16.mxu0 0
        %668 = vmatpush1.bf16.msra.mxu0 0
        %669 = vmatprep.subr.bf16.mxu0 0
        %670 = vmatpush1.bf16.msra.mxu0 0
        %671 = vmatprep.subr.bf16.mxu0 0
        %672 = vmatpush1.bf16.msra.mxu0 0
        %673 = vmatprep.mubr.bf16.mxu0 0
        %674 = vmatmul.mubr.bf16.gmra.mrb[0].mxu0 %v639
        %v675 = vpop.f32.mrb[0].mxu0
        %v676 = vadd.f32 0.0, %v675
        %v677 = vpop.f32.mrb[0].mxu0
        %v678 = vpop.f32.mrb[0].mxu0
        %v679 = vpop.f32.mrb[0].mxu0
        %680 = vdwg.mxu0
        %v681 = vld [vmem:[%s493] sm:$0xf]
        %v686 = vunpack.c.l.b16 %v562
        %v687 = vunpack.c.l.b16 %v563
        %v688 = vunpack.c.l.b16 %v564
        %v689 = vunpack.c.l.b16 %v565
        %v690 = vpack.c.b16 %v687, %v686
        %v691 = vpack.c.b16 %v689, %v688
        %v695 = vsel %vm580, %v681, 0
        %697 = vmatprep.subr.bf16.mxu0 0
        %698 = vmatpush1.bf16.msra.mxu0 %v690
        %699 = vmatprep.subr.bf16.mxu0 0
        %700 = vmatpush1.bf16.msra.mxu0 %v691
        %701 = vmatprep.subr.bf16.mxu0 0
        %702 = vmatpush1.bf16.msra.mxu0 0
        %703 = vmatprep.subr.bf16.mxu0 0
        %704 = vmatpush1.bf16.msra.mxu0 0
        %705 = vmatprep.subr.bf16.mxu0 0
        %706 = vmatpush1.bf16.msra.mxu0 0
        %707 = vmatprep.subr.bf16.mxu0 0
        %708 = vmatpush1.bf16.msra.mxu0 0
        %709 = vmatprep.subr.bf16.mxu0 0
        %710 = vmatpush1.bf16.msra.mxu0 0
        %711 = vmatprep.subr.bf16.mxu0 0
        %712 = vmatpush1.bf16.msra.mxu0 0
        %713 = vmatprep.subr.bf16.mxu0 0
        %714 = vmatpush1.bf16.msra.mxu0 0
        %715 = vmatprep.subr.bf16.mxu0 0
        %716 = vmatpush1.bf16.msra.mxu0 0
        %717 = vmatprep.subr.bf16.mxu0 0
        %718 = vmatpush1.bf16.msra.mxu0 0
        %719 = vmatprep.subr.bf16.mxu0 0
        %720 = vmatpush1.bf16.msra.mxu0 0
        %721 = vmatprep.subr.bf16.mxu0 0
        %722 = vmatpush1.bf16.msra.mxu0 0
        %723 = vmatprep.subr.bf16.mxu0 0
        %724 = vmatpush1.bf16.msra.mxu0 0
        %725 = vmatprep.subr.bf16.mxu0 0
        %726 = vmatpush1.bf16.msra.mxu0 0
        %727 = vmatprep.subr.bf16.mxu0 0
        %728 = vmatpush1.bf16.msra.mxu0 0
        %729 = vmatprep.mubr.bf16.mxu0 0
        %730 = vmatmul.mubr.bf16.gmra.mrb[0].mxu0 %v695
        %v731 = vpop.f32.mrb[0].mxu0
        %v732 = vadd.f32 0.0, %v731
        %v733 = vpop.f32.mrb[0].mxu0
        %v734 = vpop.f32.mrb[0].mxu0
        %v735 = vpop.f32.mrb[0].mxu0
        %736 = vdwg.mxu0
        %v737 = vpack.c.bf16 %v624, %v624
        %v738 = vpack.c.bf16 %v676, %v676
        %vm739 = vcmask 64512
        %v741 = vsel %vm739, %v737, 0
        %v744 = vsel %vm739, %v738, 0
        %746 = vmatprep.subr.bf16.mxu0 0
        %747 = vmatpush1.bf16.xpose.msra.mxu0 %v744
        %748 = vmatprep.subr.bf16.mxu0 0
        %749 = vmatpush1.bf16.xpose.msra.mxu0 0
        %750 = vmatprep.subr.bf16.mxu0 0
        %751 = vmatpush1.bf16.xpose.msra.mxu0 0
        %752 = vmatprep.subr.bf16.mxu0 0
        %753 = vmatpush1.bf16.xpose.msra.mxu0 0
        %754 = vmatprep.subr.bf16.mxu0 0
        %755 = vmatpush1.bf16.xpose.msra.mxu0 0
        %756 = vmatprep.subr.bf16.mxu0 0
        %757 = vmatpush1.bf16.xpose.msra.mxu0 0
        %758 = vmatprep.subr.bf16.mxu0 0
        %759 = vmatpush1.bf16.xpose.msra.mxu0 0
        %760 = vmatprep.subr.bf16.mxu0 0
        %761 = vmatpush1.bf16.xpose.msra.mxu0 0
        %762 = vmatprep.subr.bf16.mxu0 0
        %763 = vmatpush1.bf16.xpose.msra.mxu0 0
        %764 = vmatprep.subr.bf16.mxu0 0
        %765 = vmatpush1.bf16.xpose.msra.mxu0 0
        %766 = vmatprep.subr.bf16.mxu0 0
        %767 = vmatpush1.bf16.xpose.msra.mxu0 0
        %768 = vmatprep.subr.bf16.mxu0 0
        %769 = vmatpush1.bf16.xpose.msra.mxu0 0
        %770 = vmatprep.subr.bf16.mxu0 0
        %771 = vmatpush1.bf16.xpose.msra.mxu0 0
        %772 = vmatprep.subr.bf16.mxu0 0
        %773 = vmatpush1.bf16.xpose.msra.mxu0 0
        %774 = vmatprep.subr.bf16.mxu0 0
        %775 = vmatpush1.bf16.xpose.msra.mxu0 0
        %776 = vmatprep.subr.bf16.mxu0 0
        %777 = vmatpush1.bf16.xpose.msra.mxu0 0
        %778 = vmatprep.mubr.bf16.mxu0 0
        %779 = vmatmul.mubr.bf16.gmra.mrb[0].mxu0 %v741
        %v780 = vpop.f32.mrb[0].mxu0
        %v781 = vadd.f32 0.0, %v780
        %v782 = vpop.f32.mrb[0].mxu0
        %v783 = vpop.f32.mrb[0].mxu0
        %v784 = vpop.f32.mrb[0].mxu0
        %785 = vdwg.mxu0
        %v786 = vsel %vm739, %v781, -inf
        %787 = vmax.xlane.f32.xlu0 %v786
        %v788 = vpop.xlane.xlu0 %787
        %v789 = vsub.f32 %v781, %v788
        %v790 = vmul.f32 %v789, 1.442695
        %v791 = vpow.pop %v790
        %v792 = vsel %vm739, %v791, 0.0
        %793 = vadd.xlane.f32.xlu0 %v792
        %v794 = vpop.xlane.xlu0 %793
        %v795 = vrcp.pop %v794
        %v796 = vmul.f32 %v791, %v795
        %797 = vst.msk [vmem:[%s478] sm:$0xff] %vm739, %v796
        %v798 = vpack.c.bf16 %v796, %v796
        %v799 = vpack.c.bf16 %v732, %v732
        %v801 = vsel %vm739, %v798, 0
        %vm803 = vcmask 1043456
        %v805 = vsel %vm803, %v799, 0
        %807 = vmatprep.subr.bf16.mxu0 0
        %808 = vmatpush1.bf16.msra.mxu0 %v805
        %809 = vmatprep.subr.bf16.mxu0 0
        %810 = vmatpush1.bf16.msra.mxu0 0
        %811 = vmatprep.subr.bf16.mxu0 0
        %812 = vmatpush1.bf16.msra.mxu0 0
        %813 = vmatprep.subr.bf16.mxu0 0
        %814 = vmatpush1.bf16.msra.mxu0 0
        %815 = vmatprep.subr.bf16.mxu0 0
        %816 = vmatpush1.bf16.msra.mxu0 0
        %817 = vmatprep.subr.bf16.mxu0 0
        %818 = vmatpush1.bf16.msra.mxu0 0
        %819 = vmatprep.subr.bf16.mxu0 0
        %820 = vmatpush1.bf16.msra.mxu0 0
        %821 = vmatprep.subr.bf16.mxu0 0
        %822 = vmatpush1.bf16.msra.mxu0 0
        %823 = vmatprep.subr.bf16.mxu0 0
        %824 = vmatpush1.bf16.msra.mxu0 0
        %825 = vmatprep.subr.bf16.mxu0 0
        %826 = vmatpush1.bf16.msra.mxu0 0
        %827 = vmatprep.subr.bf16.mxu0 0
        %828 = vmatpush1.bf16.msra.mxu0 0
        %829 = vmatprep.subr.bf16.mxu0 0
        %830 = vmatpush1.bf16.msra.mxu0 0
        %831 = vmatprep.subr.bf16.mxu0 0
        %832 = vmatpush1.bf16.msra.mxu0 0
        %833 = vmatprep.subr.bf16.mxu0 0
        %834 = vmatpush1.bf16.msra.mxu0 0
        %835 = vmatprep.subr.bf16.mxu0 0
        %836 = vmatpush1.bf16.msra.mxu0 0
        %837 = vmatprep.subr.bf16.mxu0 0
        %838 = vmatpush1.bf16.msra.mxu0 0
        %839 = vmatprep.mubr.bf16.mxu0 0
        %840 = vmatmul.mubr.bf16.gmra.mrb[0].mxu0 %v801
        %v841 = vpop.f32.mrb[0].mxu0
        %v842 = vadd.f32 0.0, %v841
        %v843 = vpop.f32.mrb[0].mxu0
        %v844 = vpop.f32.mrb[0].mxu0
        %v845 = vpop.f32.mrb[0].mxu0
        %846 = vdwg.mxu0
        %v847 = vld [vmem:[#allocation3] sm:$0xff]
        %v848 = vpack.c.bf16 %v842, %v842
        %v850 = vsel %vm739, %v848, 0
        %v853 = vsel %vm803, %v566, 0
        %855 = vmatprep.subr.bf16.mxu0 0
        %856 = vmatpush1.bf16.msra.mxu0 %v853
        %857 = vmatprep.subr.bf16.mxu0 0
        %858 = vmatpush1.bf16.msra.mxu0 0
        %859 = vmatprep.subr.bf16.mxu0 0
        %860 = vmatpush1.bf16.msra.mxu0 0
        %861 = vmatprep.subr.bf16.mxu0 0
        %862 = vmatpush1.bf16.msra.mxu0 0
        %863 = vmatprep.subr.bf16.mxu0 0
        %864 = vmatpush1.bf16.msra.mxu0 0
        %865 = vmatprep.subr.bf16.mxu0 0
        %866 = vmatpush1.bf16.msra.mxu0 0
        %867 = vmatprep.subr.bf16.mxu0 0
        %868 = vmatpush1.bf16.msra.mxu0 0
        %869 = vmatprep.subr.bf16.mxu0 0
        %870 = vmatpush1.bf16.msra.mxu0 0
        %871 = vmatprep.subr.bf16.mxu0 0
        %872 = vmatpush1.bf16.msra.mxu0 0
        %873 = vmatprep.subr.bf16.mxu0 0
        %874 = vmatpush1.bf16.msra.mxu0 0
        %875 = vmatprep.subr.bf16.mxu0 0
        %876 = vmatpush1.bf16.msra.mxu0 0
        %877 = vmatprep.subr.bf16.mxu0 0
        %878 = vmatpush1.bf16.msra.mxu0 0
        %879 = vmatprep.subr.bf16.mxu0 0
        %880 = vmatpush1.bf16.msra.mxu0 0
        %881 = vmatprep.subr.bf16.mxu0 0
        %882 = vmatpush1.bf16.msra.mxu0 0
        %883 = vmatprep.subr.bf16.mxu0 0
        %884 = vmatpush1.bf16.msra.mxu0 0
        %885 = vmatprep.subr.bf16.mxu0 0
        %886 = vmatpush1.bf16.msra.mxu0 0
        %887 = vmatprep.mubr.bf16.mxu0 0
        %888 = vmatmul.mubr.bf16.gmra.mrb[0].mxu0 %v850
        %v889 = vpop.f32.mrb[0].mxu0
        %v890 = vadd.f32 0.0, %v889
        %v891 = vpop.f32.mrb[0].mxu0
        %v892 = vpop.f32.mrb[0].mxu0
        %v893 = vpop.f32.mrb[0].mxu0
        %894 = vdwg.mxu0
        %v895 = vadd.f32 %v847, %v890
        %896 = vst.msk [vmem:[#allocation3] sm:$0xff] %vm580, %v895
        %p897 = scmp.eq.s32.totalorder %s35, 3
        // Predicated region
        $region61: #{tpu_custom_call.1} parent=55 // pred_check
          %p898 = pneg %p897
        $region62: #{tpu_custom_call.1} parent=55 // pred_check_branch
          %900 = sbr.rel (%p898) target = $region64
        $region63: #{tpu_custom_call.1} parent=55 // pred_region
          %v901 = vld [vmem:[#allocation3] sm:$0xff]
          %v902 = vld [vmem:[%s485] sm:$0xff]
          %v903 = vadd.f32 %v901, %v902
          %904 = vst.msk [vmem:[%s471] sm:$0xff] %vm580, %v903
        $region64: #{tpu_custom_call.1} parent=55 // pred_fallthru
          _
        %s905 = sand.u32 %s283, 1
        %s906 = scalar_lea.sflag [#allocation5], %s905
        %s907 = sand.u32 %s283, 1
        %s908 = smul.addr %s907, 8
        %s909 = scalar_lea.vmem [#allocation4], %s908
        %s910 = sand.u32 %s313, 1
        %s911 = scalar_lea.sflag [#allocation7], %s910
        %s912 = sand.u32 %s313, 1
        %s913 = smul.addr %s912, 8
        %s914 = scalar_lea.vmem [#allocation6], %s913
        // Predicated region
        $region65: #{tpu_custom_call.1} parent=55 // pred_check
          %p915 = pneg %p293
        $region66: #{tpu_custom_call.1} parent=55 // pred_check_branch
          %917 = sbr.rel (%p915) target = $region68
        $region67: #{tpu_custom_call.1} parent=55 // pred_region
          %s919 = ssub.s32 128, 128
          %920 = vsyncadd %s906, %s919
          %s921 = sadd.s32 %s34, %s33
          %s922 = smul.addr %s921, 128
          %s923 = scalar_lea.hbm %s9, %s922
          %s925 = sshll.u32 %s909, 4
          %s926 = int_to_ptr.vmem [resolvable:$true] %s925
          %928 = dma.vmem_to_hbm [thread:$0]  %s926, 128, %s923, %s906
        $region68: #{tpu_custom_call.1} parent=55 // pred_fallthru
          _
        // Predicated region
        $region69: #{tpu_custom_call.1} parent=55 // pred_check
          %p929 = pneg %p323
        $region70: #{tpu_custom_call.1} parent=55 // pred_check_branch
          %931 = sbr.rel (%p929) target = $region72
        $region71: #{tpu_custom_call.1} parent=55 // pred_region
          %s933 = ssub.s32 128, 128
          %934 = vsyncadd %s911, %s933
          %s935 = sadd.s32 %s34, %s35
          %s936 = smul.addr %s33, 4
          %s937 = sadd.s32 %s935, %s936
          %s938 = smul.addr %s937, 128
          %s939 = scalar_lea.hbm %s10, %s938
          %s941 = sshll.u32 %s914, 4
          %s942 = int_to_ptr.vmem [resolvable:$true] %s941
          %944 = dma.vmem_to_hbm [thread:$0]  %s942, 128, %s939, %s911
        $region72: #{tpu_custom_call.1} parent=55 // pred_fallthru
          _
      $region56: #{tpu_custom_call.1} parent=5 // pred_fallthru
        _
      %p945 = scmp.le.s32.totalorder 2, %s23
      // Predicated region
      $region73: #{tpu_custom_call.1} parent=5 // pred_check
        %p946 = pneg %p945
      $region74: #{tpu_custom_call.1} parent=5 // pred_check_branch
        %948 = sbr.rel (%p946) target = $region76
      $region75: #{tpu_custom_call.1} parent=5 // pred_region
        %s949 = ssub.s32 %s23, 2
        // Predicated region
        $region77: #{tpu_custom_call.1} parent=75 // pred_check
          %p950 = pneg %p299
        $region78: #{tpu_custom_call.1} parent=75 // pred_check_branch
          %952 = sbr.rel (%p950) target = $region80
        $region79: #{tpu_custom_call.1} parent=75 // pred_region
          %s953 = sand.u32 %s284, 1
          %s954 = scalar_lea.sflag [#allocation5], %s953
          %s955 = sand.u32 %s284, 1
          %s956 = smul.addr %s955, 8
          %s957 = scalar_lea.vmem [#allocation4], %s956
          %958 = dma.done %s954, 128
        $region80: #{tpu_custom_call.1} parent=75 // pred_fallthru
          _
        // Predicated region
        $region81: #{tpu_custom_call.1} parent=75 // pred_check
          %p959 = pneg %p329
        $region82: #{tpu_custom_call.1} parent=75 // pred_check_branch
          %961 = sbr.rel (%p959) target = $region84
        $region83: #{tpu_custom_call.1} parent=75 // pred_region
          %s962 = sand.u32 %s314, 1
          %s963 = scalar_lea.sflag [#allocation7], %s962
          %s964 = sand.u32 %s314, 1
          %s965 = smul.addr %s964, 8
          %s966 = scalar_lea.vmem [#allocation6], %s965
          %967 = dma.done %s963, 128
        $region84: #{tpu_custom_call.1} parent=75 // pred_fallthru
          _
      $region76: #{tpu_custom_call.1} parent=5 // pred_fallthru
        _
    $region6: #{tpu_custom_call.1} parent=1 // loop_footer
      %s27 = sadd.s32 1, %s23
    $region7: #{tpu_custom_call.1} parent=1 // loop_footer_branch
      %22 = sbr.rel target = $region3
    $region8: #{tpu_custom_call.1} parent=1 // loop_exit
      _
    %968 = vsyncpa [#allocation5], 1
    %s969 = scalar_lea.sflag [#allocation5], 1
    %970 = vsyncpa %s969, 1
    %971 = vsyncpa [#allocation7], 1
    %s972 = scalar_lea.sflag [#allocation7], 1
    %973 = vsyncpa %s972, 1

</llo_original>
